<compile_context>
chip_gen: v7x
topology: tpu7x:2x2x1
jax: 0.10.0
libtpu: 0.0.40
codegen_flags: <defaults>
</compile_context>

<pallas_src>
import jax
import jax.numpy as jnp
from jax import lax
from jax.experimental import pallas as pl
from jax.experimental.pallas import tpu as pltpu

# Hyperparameters implied by the module
m = 2          # embedding dim
n_step = 2     # context length
n_hidden = 2   # hidden size
n_class = 7    # vocabulary size (synthetic)

K1 = n_step * m
SUBLANE = 8


def _round_up(x, mult):
    return ((x + mult - 1) // mult) * mult


def _pick_tb(batch, tb_max=1024):
    """Batch-tile rows (multiple of 8).

    Large batches -> ~1024-row tiles (amortize ~0.35 us/step overhead); mid
    batches -> 2 balanced grid steps so v7x's two TensorCores both get work;
    tiny batches -> a single 8-row step.
    """
    bp = _round_up(batch, SUBLANE)
    if bp <= SUBLANE:
        return SUBLANE
    if bp <= tb_max:
        return _round_up(-(-bp // 2), SUBLANE)   # split into 2 balanced steps
    return tb_max


def nnlm_kernel(ids_ref, c_ref, h_ref, w_ref, u_ref, d_ref, b_ref, out_ref):
    """One batch tile per grid step.

    ids_ref: (tb, n_step)        int32   streamed per grid step
    c_ref:   (n_class, m)        f32     resident embedding table
    h_ref:   (K1, n_hidden)      f32     resident
    w_ref:   (K1, n_class)       f32     resident
    u_ref:   (n_hidden, n_class) f32     resident
    d_ref:   (1, n_hidden)       f32     resident
    b_ref:   (1, n_class)        f32     resident
    out_ref: (tb, n_class)       f32     output tile (masked store on tail)
    """
    ids = ids_ref[...]                                   # (tb, n_step) int32
    c = c_ref[...]                                       # (n_class, m)
    h = h_ref[...]                                       # (K1, n_hidden)
    w = w_ref[...]                                       # (K1, n_class)
    vocab = lax.broadcasted_iota(jnp.int32, (1, n_class), 1)

    acc_h = None
    acc_o = None
    # Static unroll over context positions (n_step = 2): embedding gather as a
    # one-hot matmul, and per-position slices of H / W accumulated in f32.
    for s in range(n_step):
        oh = (ids[:, s:s + 1] == vocab).astype(jnp.float32)            # (tb, n_class)
        x_s = jnp.dot(oh, c, preferred_element_type=jnp.float32)       # (tb, m)
        hs = jnp.dot(x_s, h[s * m:(s + 1) * m, :],
                     preferred_element_type=jnp.float32)               # (tb, n_hidden)
        ws = jnp.dot(x_s, w[s * m:(s + 1) * m, :],
                     preferred_element_type=jnp.float32)               # (tb, n_class)
        acc_h = hs if acc_h is None else acc_h + hs
        acc_o = ws if acc_o is None else acc_o + ws

    hidden = jnp.tanh(d_ref[...] + acc_h)                              # EUP tanh, f32
    logits = b_ref[...] + acc_o + jnp.dot(hidden, u_ref[...],
                                          preferred_element_type=jnp.float32)
    out_ref[...] = logits.astype(out_ref.dtype)


def nnlm_forward(X_tokens, params, *, tb=None):
    """X_tokens: (B, n_step) int32.  Returns logits (B, n_class) float32."""
    C, H, W, d, U, b = (
        params["C"], params["H"], params["W"], params["d"], params["U"], params["b"]
    )
    B = X_tokens.shape[0]
    if tb is None:
        tb = _pick_tb(B)
    grid = (pl.cdiv(B, tb),)

    d2 = d.reshape(1, n_hidden)
    b2 = b.reshape(1, n_class)

    out = pl.pallas_call(
        nnlm_kernel,
        out_shape=jax.ShapeDtypeStruct((B, n_class), jnp.float32),
        grid=grid,
        in_specs=[
            pl.BlockSpec((tb, n_step), lambda i: (i, 0)),        # ids: streamed
            pl.BlockSpec((n_class, m), lambda i: (0, 0)),        # C: resident
            pl.BlockSpec((K1, n_hidden), lambda i: (0, 0)),      # H: resident
            pl.BlockSpec((K1, n_class), lambda i: (0, 0)),       # W: resident
            pl.BlockSpec((n_hidden, n_class), lambda i: (0, 0)), # U: resident
            pl.BlockSpec((1, n_hidden), lambda i: (0, 0)),       # d: resident
            pl.BlockSpec((1, n_class), lambda i: (0, 0)),        # b: resident
        ],
        out_specs=pl.BlockSpec((tb, n_class), lambda i: (i, 0)),
        compiler_params=pltpu.CompilerParams(
            dimension_semantics=("parallel",),   # shards batch across v7x's 2 TCs
        ),
    )(X_tokens.astype(jnp.int32), C, H, W, U, d2, b2)

    return out


def init_params(key):
    kC, kH, kW, kd, kU, kb = jax.random.split(key, 6)
    return {
        "C": jax.random.normal(kC, (n_class, m), jnp.float32),   # nn.Embedding weight
        "H": jax.random.normal(kH, (n_step * m, n_hidden), jnp.float32),
        "W": jax.random.normal(kW, (n_step * m, n_class), jnp.float32),
        "d": jax.random.normal(kd, (n_hidden,), jnp.float32),
        "U": jax.random.normal(kU, (n_hidden, n_class), jnp.float32),
        "b": jax.random.normal(kb, (n_class,), jnp.float32),
    }


def nnlm_reference(X_tokens, params):
    """Pure-JAX reference matching the PyTorch forward exactly."""
    x = jnp.take(params["C"], X_tokens, axis=0).reshape(X_tokens.shape[0], n_step * m)
    tanh = jnp.tanh(params["d"] + x @ params["H"])
    return params["b"] + x @ params["W"] + tanh @ params["U"]


if __name__ == "__main__":
    key = jax.random.PRNGKey(0)
    k_param, k_in = jax.random.split(key)

    params = init_params(k_param)

    batch = 2
    X_tokens = jax.random.randint(k_in, (batch, n_step), 0, n_class, dtype=jnp.int32)

    fwd = jax.jit(lambda toks: nnlm_forward(toks, params))
    out = jax.block_until_ready(fwd(X_tokens))

    ref = nnlm_reference(X_tokens, params)
    assert out.shape == (batch, n_class)
    assert jnp.allclose(out, ref, atol=1e-5, rtol=1e-5), "mismatch vs reference"

    print("KERNEL_OK")
</pallas_src>

<mosaic_0001>
module attributes {stable_mosaic.version = 11 : i64} {
  func.func @nnlm_kernel(%arg0: i32, %arg1: memref<8x2xi32, #tpu.memory_space<vmem>>, %arg2: memref<7x2xf32, #tpu.memory_space<vmem>>, %arg3: memref<4x2xf32, #tpu.memory_space<vmem>>, %arg4: memref<4x7xf32, #tpu.memory_space<vmem>>, %arg5: memref<2x7xf32, #tpu.memory_space<vmem>>, %arg6: memref<1x2xf32, #tpu.memory_space<vmem>>, %arg7: memref<1x7xf32, #tpu.memory_space<vmem>>, %arg8: memref<8x7xf32, #tpu.memory_space<vmem>>) attributes {dimension_semantics = [#tpu.dimension_semantics<parallel>], iteration_bounds = array<i64: 1>, scalar_prefetch = 0 : i64, scratch_operands = 0 : i64, tpu.core_type = #tpu.core_type<tc>, window_params = [{transform_indices = @transform_0, window_bounds = array<i64: 8, 2>}, {pipeline_mode = #tpu.pipeline_mode<synchronous>, transform_indices = @transform_1, window_bounds = array<i64: 7, 2>}, {pipeline_mode = #tpu.pipeline_mode<synchronous>, transform_indices = @transform_2, window_bounds = array<i64: 4, 2>}, {pipeline_mode = #tpu.pipeline_mode<synchronous>, transform_indices = @transform_3, window_bounds = array<i64: 4, 7>}, {pipeline_mode = #tpu.pipeline_mode<synchronous>, transform_indices = @transform_4, window_bounds = array<i64: 2, 7>}, {pipeline_mode = #tpu.pipeline_mode<synchronous>, transform_indices = @transform_5, window_bounds = array<i64: 1, 2>}, {pipeline_mode = #tpu.pipeline_mode<synchronous>, transform_indices = @transform_6, window_bounds = array<i64: 1, 7>}, {transform_indices = @transform_7, window_bounds = array<i64: 8, 7>}]} {
    %c0 = arith.constant 0 : index
    %c0_0 = arith.constant 0 : index
    %0 = vector.load %arg1[%c0, %c0_0] : memref<8x2xi32, #tpu.memory_space<vmem>>, vector<8x2xi32>
    %c0_1 = arith.constant 0 : index
    %c0_2 = arith.constant 0 : index
    %1 = vector.load %arg2[%c0_1, %c0_2] : memref<7x2xf32, #tpu.memory_space<vmem>>, vector<7x2xf32>
    %c0_3 = arith.constant 0 : index
    %c0_4 = arith.constant 0 : index
    %2 = vector.load %arg3[%c0_3, %c0_4] : memref<4x2xf32, #tpu.memory_space<vmem>>, vector<4x2xf32>
    %c0_5 = arith.constant 0 : index
    %c0_6 = arith.constant 0 : index
    %3 = vector.load %arg4[%c0_5, %c0_6] : memref<4x7xf32, #tpu.memory_space<vmem>>, vector<4x7xf32>
    %4 = tpu.iota {dimensions = array<i32: 1>} : vector<1x7xi32>
    %5 = vector.extract_strided_slice %0 {offsets = [0, 0], sizes = [8, 1], strides = [1, 1]} : vector<8x2xi32> to vector<8x1xi32>
    %6 = vector.broadcast %5 : vector<8x1xi32> to vector<8x7xi32>
    %7 = vector.broadcast %4 : vector<1x7xi32> to vector<8x7xi32>
    %8 = arith.cmpi eq, %6, %7 : vector<8x7xi32>
    %9 = arith.extui %8 : vector<8x7xi1> to vector<8x7xi32>
    %10 = arith.sitofp %9 : vector<8x7xi32> to vector<8x7xf32>
    %cst = arith.constant dense<0.000000e+00> : vector<8x2xf32>
    %11 = tpu.matmul %10, %1, %cst {dimension_numbers = #tpu.dot_dimension_numbers<[1], [0], [0], [1], [0, 0, 1, 1], [], []>} : vector<8x7xf32>, vector<7x2xf32>, vector<8x2xf32> -> vector<8x2xf32>
    %12 = vector.extract_strided_slice %2 {offsets = [0, 0], sizes = [2, 2], strides = [1, 1]} : vector<4x2xf32> to vector<2x2xf32>
    %cst_7 = arith.constant dense<0.000000e+00> : vector<8x2xf32>
    %13 = tpu.matmul %11, %12, %cst_7 {dimension_numbers = #tpu.dot_dimension_numbers<[1], [0], [0], [1], [0, 0, 1, 1], [], []>} : vector<8x2xf32>, vector<2x2xf32>, vector<8x2xf32> -> vector<8x2xf32>
    %14 = vector.extract_strided_slice %3 {offsets = [0, 0], sizes = [2, 7], strides = [1, 1]} : vector<4x7xf32> to vector<2x7xf32>
    %cst_8 = arith.constant dense<0.000000e+00> : vector<8x7xf32>
    %15 = tpu.matmul %11, %14, %cst_8 {dimension_numbers = #tpu.dot_dimension_numbers<[1], [0], [0], [1], [0, 0, 1, 1], [], []>} : vector<8x2xf32>, vector<2x7xf32>, vector<8x7xf32> -> vector<8x7xf32>
    %16 = vector.extract_strided_slice %0 {offsets = [0, 1], sizes = [8, 1], strides = [1, 1]} : vector<8x2xi32> to vector<8x1xi32>
    %17 = vector.broadcast %16 : vector<8x1xi32> to vector<8x7xi32>
    %18 = vector.broadcast %4 : vector<1x7xi32> to vector<8x7xi32>
    %19 = arith.cmpi eq, %17, %18 : vector<8x7xi32>
    %20 = arith.extui %19 : vector<8x7xi1> to vector<8x7xi32>
    %21 = arith.sitofp %20 : vector<8x7xi32> to vector<8x7xf32>
    %cst_9 = arith.constant dense<0.000000e+00> : vector<8x2xf32>
    %22 = tpu.matmul %21, %1, %cst_9 {dimension_numbers = #tpu.dot_dimension_numbers<[1], [0], [0], [1], [0, 0, 1, 1], [], []>} : vector<8x7xf32>, vector<7x2xf32>, vector<8x2xf32> -> vector<8x2xf32>
    %23 = vector.extract_strided_slice %2 {offsets = [2, 0], sizes = [2, 2], strides = [1, 1]} : vector<4x2xf32> to vector<2x2xf32>
    %cst_10 = arith.constant dense<0.000000e+00> : vector<8x2xf32>
    %24 = tpu.matmul %22, %23, %cst_10 {dimension_numbers = #tpu.dot_dimension_numbers<[1], [0], [0], [1], [0, 0, 1, 1], [], []>} : vector<8x2xf32>, vector<2x2xf32>, vector<8x2xf32> -> vector<8x2xf32>
    %25 = vector.extract_strided_slice %3 {offsets = [2, 0], sizes = [2, 7], strides = [1, 1]} : vector<4x7xf32> to vector<2x7xf32>
    %cst_11 = arith.constant dense<0.000000e+00> : vector<8x7xf32>
    %26 = tpu.matmul %22, %25, %cst_11 {dimension_numbers = #tpu.dot_dimension_numbers<[1], [0], [0], [1], [0, 0, 1, 1], [], []>} : vector<8x2xf32>, vector<2x7xf32>, vector<8x7xf32> -> vector<8x7xf32>
    %27 = arith.addf %13, %24 : vector<8x2xf32>
    %28 = arith.addf %15, %26 : vector<8x7xf32>
    %c0_12 = arith.constant 0 : index
    %c0_13 = arith.constant 0 : index
    %29 = vector.load %arg6[%c0_12, %c0_13] : memref<1x2xf32, #tpu.memory_space<vmem>>, vector<1x2xf32>
    %30 = vector.broadcast %29 : vector<1x2xf32> to vector<8x2xf32>
    %31 = arith.addf %30, %27 : vector<8x2xf32>
    %32 = math.tanh %31 : vector<8x2xf32>
    %c0_14 = arith.constant 0 : index
    %c0_15 = arith.constant 0 : index
    %33 = vector.load %arg7[%c0_14, %c0_15] : memref<1x7xf32, #tpu.memory_space<vmem>>, vector<1x7xf32>
    %34 = vector.broadcast %33 : vector<1x7xf32> to vector<8x7xf32>
    %35 = arith.addf %34, %28 : vector<8x7xf32>
    %c0_16 = arith.constant 0 : index
    %c0_17 = arith.constant 0 : index
    %36 = vector.load %arg5[%c0_16, %c0_17] : memref<2x7xf32, #tpu.memory_space<vmem>>, vector<2x7xf32>
    %cst_18 = arith.constant dense<0.000000e+00> : vector<8x7xf32>
    %37 = tpu.matmul %32, %36, %cst_18 {dimension_numbers = #tpu.dot_dimension_numbers<[1], [0], [0], [1], [0, 0, 1, 1], [], []>} : vector<8x2xf32>, vector<2x7xf32>, vector<8x7xf32> -> vector<8x7xf32>
    %38 = arith.addf %35, %37 : vector<8x7xf32>
    %c0_19 = arith.constant 0 : index
    %c0_20 = arith.constant 0 : index
    %39 = vector.load %arg8[%c0_19, %c0_20] : memref<8x7xf32, #tpu.memory_space<vmem>>, vector<8x7xf32>
    tpu.vector_store %arg8[%c0_19, %c0_20], %38 {strides = array<i32>} : memref<8x7xf32, #tpu.memory_space<vmem>>, vector<8x7xf32>,
    return
  }
  func.func @transform_0(%arg0: i32) -> (i32, i32) {
    %c0_i32 = arith.constant 0 : i32
    %c0_i32_0 = arith.constant 0 : i32
    return %arg0, %c0_i32 : i32, i32
  }
  func.func @transform_1(%arg0: i32) -> (i32, i32) {
    %c0_i32 = arith.constant 0 : i32
    %c0_i32_0 = arith.constant 0 : i32
    %c0_i32_1 = arith.constant 0 : i32
    return %c0_i32, %c0_i32_0 : i32, i32
  }
  func.func @transform_2(%arg0: i32) -> (i32, i32) {
    %c0_i32 = arith.constant 0 : i32
    %c0_i32_0 = arith.constant 0 : i32
    %c0_i32_1 = arith.constant 0 : i32
    return %c0_i32, %c0_i32_0 : i32, i32
  }
  func.func @transform_3(%arg0: i32) -> (i32, i32) {
    %c0_i32 = arith.constant 0 : i32
    %c0_i32_0 = arith.constant 0 : i32
    %c0_i32_1 = arith.constant 0 : i32
    return %c0_i32, %c0_i32_0 : i32, i32
  }
  func.func @transform_4(%arg0: i32) -> (i32, i32) {
    %c0_i32 = arith.constant 0 : i32
    %c0_i32_0 = arith.constant 0 : i32
    %c0_i32_1 = arith.constant 0 : i32
    return %c0_i32, %c0_i32_0 : i32, i32
  }
  func.func @transform_5(%arg0: i32) -> (i32, i32) {
    %c0_i32 = arith.constant 0 : i32
    %c0_i32_0 = arith.constant 0 : i32
    %c0_i32_1 = arith.constant 0 : i32
    return %c0_i32, %c0_i32_0 : i32, i32
  }
  func.func @transform_6(%arg0: i32) -> (i32, i32) {
    %c0_i32 = arith.constant 0 : i32
    %c0_i32_0 = arith.constant 0 : i32
    %c0_i32_1 = arith.constant 0 : i32
    return %c0_i32, %c0_i32_0 : i32, i32
  }
  func.func @transform_7(%arg0: i32) -> (i32, i32) {
    %c0_i32 = arith.constant 0 : i32
    %c0_i32_0 = arith.constant 0 : i32
    return %arg0, %c0_i32 : i32, i32
  }
}

</mosaic_0001>

<llo_original>
// kernel: _lambda_.1
$region0: #{_lambda_.1}
  #allocation0 [shape = 'u32[]', space=smem, size = 0x4, offset = 0x4, fixed_abs, tag = 'smem constant byte address 0x4 - core index']
  #allocation1 [shape = 'u32[144,128]{1,0:T(1,128)}', space=vmem, size = 0x12000, scoped, tag = 'internal scratch']
  %s0 = inlined_call_operand.hbm [shape: s32[2,2], index: 0, kind: input, shape index: {}]
  %s1 = inlined_call_operand.hbm [shape: f32[7,2], index: 1, kind: input, shape index: {}]
  %s2 = inlined_call_operand.hbm [shape: f32[4,2], index: 2, kind: input, shape index: {}]
  %s3 = inlined_call_operand.vmem [shape: f32[4,7], index: 3, kind: input, shape index: {}]
  %s4 = inlined_call_operand.vmem [shape: f32[2,7], index: 4, kind: input, shape index: {}]
  %s5 = inlined_call_operand.vmem [shape: f32[1,2], index: 5, kind: input, shape index: {}]
  %s6 = inlined_call_operand.vmem [shape: f32[1,7], index: 6, kind: input, shape index: {}]
  %s7 = inlined_call_operand.hbm [shape: f32[2,7], index: 7, kind: output, shape index: {}]
  %s8 = sld [smem:[#allocation0]]
  $region50: #{_lambda_.1} parent=0
    _
  %s10 = ssub.s32 1, %s8
  %s11 = scalar_select 0, %s10, %s8
  $region1: #{_lambda_.1} parent=0
    #allocation2 [shape = 'u8[4096]{0}', space=vmem, size = 0x1000, scoped, tag = 'input window, operand 0, single buffered']
    #allocation3 [shape = 's32[1]{0}', space=sflag, size = 0x4, scoped, tag = 'scoped memory for _lambda_.1']
    #allocation4 [shape = 's32[1]{0}', space=sflag, size = 0x4, scoped, tag = 'scoped memory for _lambda_.1']
    #allocation5 [shape = 'u8[4096]{0}', space=vmem, size = 0x1000, scoped, tag = 'input window, operand 1, single buffered']
    #allocation6 [shape = 's32[1]{0}', space=sflag, size = 0x4, scoped, tag = 'scoped memory for _lambda_.1']
    #allocation7 [shape = 'u8[2048]{0}', space=vmem, size = 0x800, scoped, tag = 'input window, operand 2, single buffered']
    #allocation8 [shape = 'u8[4096]{0}', space=vmem, size = 0x1000, scoped, tag = 'output window, operand 0, single buffered']
    %12 = vsyncpa [#allocation3], 0
    %13 = vsyncpa [#allocation6], 0
    %14 = vsyncpa [#allocation4], 0
    // Predicated region
    $region2: #{_lambda_.1} parent=1 // pred_check
      _
    $region3: #{_lambda_.1} parent=1 // pred_check_branch
      %16 = sbr.rel (0) target = $region5
    $region4: #{_lambda_.1} parent=1 // pred_region
      %s18 = ssub.s32 128, 32
      %19 = vsyncadd [#allocation3], %s18
      %s20 = sshll.u32 [#allocation2], 4
      %s21 = int_to_ptr.vmem [resolvable:$true] %s20
      %26 = dma.hbm_to_vmem [thread:$0]  %s0, 32, %s21, [#allocation3], 32, 32, 2
    $region5: #{_lambda_.1} parent=1 // pred_fallthru
      _
    // Predicated region
    $region6: #{_lambda_.1} parent=1 // pred_check
      _
    $region7: #{_lambda_.1} parent=1 // pred_check_branch
      %28 = sbr.rel (0) target = $region9
    $region8: #{_lambda_.1} parent=1 // pred_region
      %s30 = ssub.s32 128, 128
      %31 = vsyncadd [#allocation6], %s30
      %s33 = sshll.u32 [#allocation5], 4
      %s34 = int_to_ptr.vmem [resolvable:$true] %s33
      %36 = dma.hbm_to_vmem [thread:$0]  %s1, 128, %s34, [#allocation6]
    $region9: #{_lambda_.1} parent=1 // pred_fallthru
      _
    // Predicated region
    $region10: #{_lambda_.1} parent=1 // pred_check
      _
    $region11: #{_lambda_.1} parent=1 // pred_check_branch
      %38 = sbr.rel (0) target = $region13
    $region12: #{_lambda_.1} parent=1 // pred_region
      %s40 = ssub.s32 64, 64
      %41 = vsyncadd [#allocation6], %s40
      %s43 = sshll.u32 [#allocation7], 4
      %s44 = int_to_ptr.vmem [resolvable:$true] %s43
      %46 = dma.hbm_to_vmem [thread:$0]  %s2, 64, %s44, [#allocation6]
    $region13: #{_lambda_.1} parent=1 // pred_fallthru
      _
    // Predicated region
    $region14: #{_lambda_.1} parent=1 // pred_check
      _
    $region15: #{_lambda_.1} parent=1 // pred_check_branch
      %48 = sbr.rel (0) target = $region17
    $region16: #{_lambda_.1} parent=1 // pred_region
      _
    $region17: #{_lambda_.1} parent=1 // pred_fallthru
      _
    // Predicated region
    $region18: #{_lambda_.1} parent=1 // pred_check
      _
    $region19: #{_lambda_.1} parent=1 // pred_check_branch
      %50 = sbr.rel (0) target = $region21
    $region20: #{_lambda_.1} parent=1 // pred_region
      _
    $region21: #{_lambda_.1} parent=1 // pred_fallthru
      _
    // Predicated region
    $region22: #{_lambda_.1} parent=1 // pred_check
      _
    $region23: #{_lambda_.1} parent=1 // pred_check_branch
      %52 = sbr.rel (0) target = $region25
    $region24: #{_lambda_.1} parent=1 // pred_region
      _
    $region25: #{_lambda_.1} parent=1 // pred_fallthru
      _
    // Predicated region
    $region26: #{_lambda_.1} parent=1 // pred_check
      _
    $region27: #{_lambda_.1} parent=1 // pred_check_branch
      %54 = sbr.rel (0) target = $region29
    $region28: #{_lambda_.1} parent=1 // pred_region
      _
    $region29: #{_lambda_.1} parent=1 // pred_fallthru
      _
    // Predicated region
    $region30: #{_lambda_.1} parent=1 // pred_check
      _
    $region31: #{_lambda_.1} parent=1 // pred_check_branch
      %56 = sbr.rel (0) target = $region33
    $region32: #{_lambda_.1} parent=1 // pred_region
      %57 = dma.done [#allocation3], 128
    $region33: #{_lambda_.1} parent=1 // pred_fallthru
      _
    // Predicated region
    $region34: #{_lambda_.1} parent=1 // pred_check
      _
    $region35: #{_lambda_.1} parent=1 // pred_check_branch
      %59 = sbr.rel (0) target = $region37
    $region36: #{_lambda_.1} parent=1 // pred_region
      %60 = dma.done [#allocation6], 128
    $region37: #{_lambda_.1} parent=1 // pred_fallthru
      _
    // Predicated region
    $region38: #{_lambda_.1} parent=1 // pred_check
      _
    $region39: #{_lambda_.1} parent=1 // pred_check_branch
      %62 = sbr.rel (0) target = $region41
    $region40: #{_lambda_.1} parent=1 // pred_region
      %63 = dma.done [#allocation6], 64
    $region41: #{_lambda_.1} parent=1 // pred_fallthru
      _
    %v64 = vld [vmem:[#allocation2] sm:$0xff]
    %v65 = vld [vmem:[#allocation5] sm:$0x7f]
    %v66 = vld [vmem:[#allocation7] sm:$0xf]
    %v67 = vld [vmem:[%s3] sm:$0xf]
    %v68 = vlaneseq
    %v69 = vand.u32 %v68, 127
    %70 = vset.pattern.permute.xlu0 0
    %71 = vperm.xlu0 %70, %v64
    %v72 = vpop.permute.xlu0 %71
    %vm73 = vcmp.eq.s32.totalorder %v72, %v69
    %v74 = vsel %vm73, 1, 0
    %v75 = vcvt.s32.f32 %v74
    %vm76 = vcmask 56320
    %v78 = vsel %vm76, %v75, 0
    %vm80 = vcmask 1046528
    %v82 = vsel %vm80, %v65, 0
    %84 = vmatprep.subr.mxu0 0.0
    %85 = vmatpush1.msra.mxu0 %v82
    %86 = vmatprep.subr.mxu0 0.0
    %87 = vmatpush1.msra.mxu0 0.0
    %88 = vmatprep.subr.mxu0 0.0
    %89 = vmatpush1.msra.mxu0 0.0
    %90 = vmatprep.subr.mxu0 0.0
    %91 = vmatpush1.msra.mxu0 0.0
    %92 = vmatprep.subr.mxu0 0.0
    %93 = vmatpush1.msra.mxu0 0.0
    %94 = vmatprep.subr.mxu0 0.0
    %95 = vmatpush1.msra.mxu0 0.0
    %96 = vmatprep.subr.mxu0 0.0
    %97 = vmatpush1.msra.mxu0 0.0
    %98 = vmatprep.subr.mxu0 0.0
    %99 = vmatpush1.msra.mxu0 0.0
    %100 = vmatprep.subr.mxu0 0.0
    %101 = vmatpush1.msra.mxu0 0.0
    %102 = vmatprep.subr.mxu0 0.0
    %103 = vmatpush1.msra.mxu0 0.0
    %104 = vmatprep.subr.mxu0 0.0
    %105 = vmatpush1.msra.mxu0 0.0
    %106 = vmatprep.subr.mxu0 0.0
    %107 = vmatpush1.msra.mxu0 0.0
    %108 = vmatprep.subr.mxu0 0.0
    %109 = vmatpush1.msra.mxu0 0.0
    %110 = vmatprep.subr.mxu0 0.0
    %111 = vmatpush1.msra.mxu0 0.0
    %112 = vmatprep.subr.mxu0 0.0
    %113 = vmatpush1.msra.mxu0 0.0
    %114 = vmatprep.subr.mxu0 0.0
    %115 = vmatpush1.msra.mxu0 0.0
    %116 = vmatprep.subr.mxu0 0.0
    %117 = vmatpush1.msra.mxu0 0.0
    %118 = vmatprep.subr.mxu0 0.0
    %119 = vmatpush1.msra.mxu0 0.0
    %120 = vmatprep.subr.mxu0 0.0
    %121 = vmatpush1.msra.mxu0 0.0
    %122 = vmatprep.subr.mxu0 0.0
    %123 = vmatpush1.msra.mxu0 0.0
    %124 = vmatprep.subr.mxu0 0.0
    %125 = vmatpush1.msra.mxu0 0.0
    %126 = vmatprep.subr.mxu0 0.0
    %127 = vmatpush1.msra.mxu0 0.0
    %128 = vmatprep.subr.mxu0 0.0
    %129 = vmatpush1.msra.mxu0 0.0
    %130 = vmatprep.subr.mxu0 0.0
    %131 = vmatpush1.msra.mxu0 0.0
    %132 = vmatprep.subr.mxu0 0.0
    %133 = vmatpush1.msra.mxu0 0.0
    %134 = vmatprep.subr.mxu0 0.0
    %135 = vmatpush1.msra.mxu0 0.0
    %136 = vmatprep.subr.mxu0 0.0
    %137 = vmatpush1.msra.mxu0 0.0
    %138 = vmatprep.subr.mxu0 0.0
    %139 = vmatpush1.msra.mxu0 0.0
    %140 = vmatprep.subr.mxu0 0.0
    %141 = vmatpush1.msra.mxu0 0.0
    %142 = vmatprep.subr.mxu0 0.0
    %143 = vmatpush1.msra.mxu0 0.0
    %144 = vmatprep.subr.mxu0 0.0
    %145 = vmatpush1.msra.mxu0 0.0
    %146 = vmatprep.subr.mxu0 0.0
    %147 = vmatpush1.msra.mxu0 0.0
    %148 = vmatprep.mubr.f32.mxu0 0.0
    %149 = vmatmul.mubr.f32.gmra.mrb[0].mxu0 %v78
    %v150 = vpop.f32.mrb[0].mxu0
    %v151 = vadd.f32 0.0, %v150
    %v152 = vpop.f32.mrb[0].mxu0
    %153 = vdwg.mxu0
    %154 = vset.pattern.permute.xlu0 1
    %155 = vperm.xlu0 %154, %v64
    %v156 = vpop.permute.xlu0 %155
    %vm157 = vcmp.eq.s32.totalorder %v156, %v69
    %v158 = vsel %vm157, 1, 0
    %v159 = vcvt.s32.f32 %v158
    %v161 = vsel %vm76, %v159, 0
    %163 = vmatprep.subr.mxu0 0.0
    %164 = vmatpush1.msra.mxu0 %v82
    %165 = vmatprep.subr.mxu0 0.0
    %166 = vmatpush1.msra.mxu0 0.0
    %167 = vmatprep.subr.mxu0 0.0
    %168 = vmatpush1.msra.mxu0 0.0
    %169 = vmatprep.subr.mxu0 0.0
    %170 = vmatpush1.msra.mxu0 0.0
    %171 = vmatprep.subr.mxu0 0.0
    %172 = vmatpush1.msra.mxu0 0.0
    %173 = vmatprep.subr.mxu0 0.0
    %174 = vmatpush1.msra.mxu0 0.0
    %175 = vmatprep.subr.mxu0 0.0
    %176 = vmatpush1.msra.mxu0 0.0
    %177 = vmatprep.subr.mxu0 0.0
    %178 = vmatpush1.msra.mxu0 0.0
    %179 = vmatprep.subr.mxu0 0.0
    %180 = vmatpush1.msra.mxu0 0.0
    %181 = vmatprep.subr.mxu0 0.0
    %182 = vmatpush1.msra.mxu0 0.0
    %183 = vmatprep.subr.mxu0 0.0
    %184 = vmatpush1.msra.mxu0 0.0
    %185 = vmatprep.subr.mxu0 0.0
    %186 = vmatpush1.msra.mxu0 0.0
    %187 = vmatprep.subr.mxu0 0.0
    %188 = vmatpush1.msra.mxu0 0.0
    %189 = vmatprep.subr.mxu0 0.0
    %190 = vmatpush1.msra.mxu0 0.0
    %191 = vmatprep.subr.mxu0 0.0
    %192 = vmatpush1.msra.mxu0 0.0
    %193 = vmatprep.subr.mxu0 0.0
    %194 = vmatpush1.msra.mxu0 0.0
    %195 = vmatprep.subr.mxu0 0.0
    %196 = vmatpush1.msra.mxu0 0.0
    %197 = vmatprep.subr.mxu0 0.0
    %198 = vmatpush1.msra.mxu0 0.0
    %199 = vmatprep.subr.mxu0 0.0
    %200 = vmatpush1.msra.mxu0 0.0
    %201 = vmatprep.subr.mxu0 0.0
    %202 = vmatpush1.msra.mxu0 0.0
    %203 = vmatprep.subr.mxu0 0.0
    %204 = vmatpush1.msra.mxu0 0.0
    %205 = vmatprep.subr.mxu0 0.0
    %206 = vmatpush1.msra.mxu0 0.0
    %207 = vmatprep.subr.mxu0 0.0
    %208 = vmatpush1.msra.mxu0 0.0
    %209 = vmatprep.subr.mxu0 0.0
    %210 = vmatpush1.msra.mxu0 0.0
    %211 = vmatprep.subr.mxu0 0.0
    %212 = vmatpush1.msra.mxu0 0.0
    %213 = vmatprep.subr.mxu0 0.0
    %214 = vmatpush1.msra.mxu0 0.0
    %215 = vmatprep.subr.mxu0 0.0
    %216 = vmatpush1.msra.mxu0 0.0
    %217 = vmatprep.subr.mxu0 0.0
    %218 = vmatpush1.msra.mxu0 0.0
    %219 = vmatprep.subr.mxu0 0.0
    %220 = vmatpush1.msra.mxu0 0.0
    %221 = vmatprep.subr.mxu0 0.0
    %222 = vmatpush1.msra.mxu0 0.0
    %223 = vmatprep.subr.mxu0 0.0
    %224 = vmatpush1.msra.mxu0 0.0
    %225 = vmatprep.subr.mxu0 0.0
    %226 = vmatpush1.msra.mxu0 0.0
    %227 = vmatprep.mubr.f32.mxu0 0.0
    %228 = vmatmul.mubr.f32.gmra.mrb[0].mxu0 %v161
    %v229 = vpop.f32.mrb[0].mxu0
    %v230 = vadd.f32 0.0, %v229
    %v231 = vpop.f32.mrb[0].mxu0
    %232 = vdwg.mxu0
    %v234 = vrot.slane %v66, 2
    %vm235 = vcmask 15360
    %v237 = vsel %vm235, %v230, 0
    %vm239 = vcmask 1041408
    %v240 = vsel %vm239, %v234, 0
    %242 = vmatprep.subr.mxu0 0.0
    %243 = vmatpush1.msra.mxu0 %v240
    %244 = vmatprep.subr.mxu0 0.0
    %245 = vmatpush1.msra.mxu0 0.0
    %246 = vmatprep.subr.mxu0 0.0
    %247 = vmatpush1.msra.mxu0 0.0
    %248 = vmatprep.subr.mxu0 0.0
    %249 = vmatpush1.msra.mxu0 0.0
    %250 = vmatprep.subr.mxu0 0.0
    %251 = vmatpush1.msra.mxu0 0.0
    %252 = vmatprep.subr.mxu0 0.0
    %253 = vmatpush1.msra.mxu0 0.0
    %254 = vmatprep.subr.mxu0 0.0
    %255 = vmatpush1.msra.mxu0 0.0
    %256 = vmatprep.subr.mxu0 0.0
    %257 = vmatpush1.msra.mxu0 0.0
    %258 = vmatprep.subr.mxu0 0.0
    %259 = vmatpush1.msra.mxu0 0.0
    %260 = vmatprep.subr.mxu0 0.0
    %261 = vmatpush1.msra.mxu0 0.0
    %262 = vmatprep.subr.mxu0 0.0
    %263 = vmatpush1.msra.mxu0 0.0
    %264 = vmatprep.subr.mxu0 0.0
    %265 = vmatpush1.msra.mxu0 0.0
    %266 = vmatprep.subr.mxu0 0.0
    %267 = vmatpush1.msra.mxu0 0.0
    %268 = vmatprep.subr.mxu0 0.0
    %269 = vmatpush1.msra.mxu0 0.0
    %270 = vmatprep.subr.mxu0 0.0
    %271 = vmatpush1.msra.mxu0 0.0
    %272 = vmatprep.subr.mxu0 0.0
    %273 = vmatpush1.msra.mxu0 0.0
    %274 = vmatprep.subr.mxu0 0.0
    %275 = vmatpush1.msra.mxu0 0.0
    %276 = vmatprep.subr.mxu0 0.0
    %277 = vmatpush1.msra.mxu0 0.0
    %278 = vmatprep.subr.mxu0 0.0
    %279 = vmatpush1.msra.mxu0 0.0
    %280 = vmatprep.subr.mxu0 0.0
    %281 = vmatpush1.msra.mxu0 0.0
    %282 = vmatprep.subr.mxu0 0.0
    %283 = vmatpush1.msra.mxu0 0.0
    %284 = vmatprep.subr.mxu0 0.0
    %285 = vmatpush1.msra.mxu0 0.0
    %286 = vmatprep.subr.mxu0 0.0
    %287 = vmatpush1.msra.mxu0 0.0
    %288 = vmatprep.subr.mxu0 0.0
    %289 = vmatpush1.msra.mxu0 0.0
    %290 = vmatprep.subr.mxu0 0.0
    %291 = vmatpush1.msra.mxu0 0.0
    %292 = vmatprep.subr.mxu0 0.0
    %293 = vmatpush1.msra.mxu0 0.0
    %294 = vmatprep.subr.mxu0 0.0
    %295 = vmatpush1.msra.mxu0 0.0
    %296 = vmatprep.subr.mxu0 0.0
    %297 = vmatpush1.msra.mxu0 0.0
    %298 = vmatprep.subr.mxu0 0.0
    %299 = vmatpush1.msra.mxu0 0.0
    %300 = vmatprep.subr.mxu0 0.0
    %301 = vmatpush1.msra.mxu0 0.0
    %302 = vmatprep.subr.mxu0 0.0
    %303 = vmatpush1.msra.mxu0 0.0
    %304 = vmatprep.subr.mxu0 0.0
    %305 = vmatpush1.msra.mxu0 0.0
    %306 = vmatprep.mubr.f32.mxu0 0.0
    %307 = vmatmul.mubr.f32.gmra.mrb[0].mxu0 %v237
    %v308 = vpop.f32.mrb[0].mxu0
    %v309 = vadd.f32 0.0, %v308
    %v310 = vpop.f32.mrb[0].mxu0
    %311 = vdwg.mxu0
    %v313 = vrot.slane %v67, 2
    %v314 = vsel %vm239, %v313, 0
    %316 = vmatprep.subr.mxu0 0.0
    %317 = vmatpush1.msra.mxu0 %v314
    %318 = vmatprep.subr.mxu0 0.0
    %319 = vmatpush1.msra.mxu0 0.0
    %320 = vmatprep.subr.mxu0 0.0
    %321 = vmatpush1.msra.mxu0 0.0
    %322 = vmatprep.subr.mxu0 0.0
    %323 = vmatpush1.msra.mxu0 0.0
    %324 = vmatprep.subr.mxu0 0.0
    %325 = vmatpush1.msra.mxu0 0.0
    %326 = vmatprep.subr.mxu0 0.0
    %327 = vmatpush1.msra.mxu0 0.0
    %328 = vmatprep.subr.mxu0 0.0
    %329 = vmatpush1.msra.mxu0 0.0
    %330 = vmatprep.subr.mxu0 0.0
    %331 = vmatpush1.msra.mxu0 0.0
    %332 = vmatprep.subr.mxu0 0.0
    %333 = vmatpush1.msra.mxu0 0.0
    %334 = vmatprep.subr.mxu0 0.0
    %335 = vmatpush1.msra.mxu0 0.0
    %336 = vmatprep.subr.mxu0 0.0
    %337 = vmatpush1.msra.mxu0 0.0
    %338 = vmatprep.subr.mxu0 0.0
    %339 = vmatpush1.msra.mxu0 0.0
    %340 = vmatprep.subr.mxu0 0.0
    %341 = vmatpush1.msra.mxu0 0.0
    %342 = vmatprep.subr.mxu0 0.0
    %343 = vmatpush1.msra.mxu0 0.0
    %344 = vmatprep.subr.mxu0 0.0
    %345 = vmatpush1.msra.mxu0 0.0
    %346 = vmatprep.subr.mxu0 0.0
    %347 = vmatpush1.msra.mxu0 0.0
    %348 = vmatprep.subr.mxu0 0.0
    %349 = vmatpush1.msra.mxu0 0.0
    %350 = vmatprep.subr.mxu0 0.0
    %351 = vmatpush1.msra.mxu0 0.0
    %352 = vmatprep.subr.mxu0 0.0
    %353 = vmatpush1.msra.mxu0 0.0
    %354 = vmatprep.subr.mxu0 0.0
    %355 = vmatpush1.msra.mxu0 0.0
    %356 = vmatprep.subr.mxu0 0.0
    %357 = vmatpush1.msra.mxu0 0.0
    %358 = vmatprep.subr.mxu0 0.0
    %359 = vmatpush1.msra.mxu0 0.0
    %360 = vmatprep.subr.mxu0 0.0
    %361 = vmatpush1.msra.mxu0 0.0
    %362 = vmatprep.subr.mxu0 0.0
    %363 = vmatpush1.msra.mxu0 0.0
    %364 = vmatprep.subr.mxu0 0.0
    %365 = vmatpush1.msra.mxu0 0.0
    %366 = vmatprep.subr.mxu0 0.0
    %367 = vmatpush1.msra.mxu0 0.0
    %368 = vmatprep.subr.mxu0 0.0
    %369 = vmatpush1.msra.mxu0 0.0
    %370 = vmatprep.subr.mxu0 0.0
    %371 = vmatpush1.msra.mxu0 0.0
    %372 = vmatprep.subr.mxu0 0.0
    %373 = vmatpush1.msra.mxu0 0.0
    %374 = vmatprep.subr.mxu0 0.0
    %375 = vmatpush1.msra.mxu0 0.0
    %376 = vmatprep.subr.mxu0 0.0
    %377 = vmatpush1.msra.mxu0 0.0
    %378 = vmatprep.subr.mxu0 0.0
    %379 = vmatpush1.msra.mxu0 0.0
    %380 = vmatprep.mubr.f32.mxu0 0.0
    %381 = vmatmul.mubr.f32.gmra.mrb[0].mxu0 %v237
    %v382 = vpop.f32.mrb[0].mxu0
    %v383 = vadd.f32 0.0, %v382
    %v384 = vpop.f32.mrb[0].mxu0
    %385 = vdwg.mxu0
    %v387 = vsel %vm235, %v151, 0
    %v389 = vsel %vm239, %v66, 0
    %391 = vmatprep.subr.mxu0 0.0
    %392 = vmatpush1.msra.mxu0 %v389
    %393 = vmatprep.subr.mxu0 0.0
    %394 = vmatpush1.msra.mxu0 0.0
    %395 = vmatprep.subr.mxu0 0.0
    %396 = vmatpush1.msra.mxu0 0.0
    %397 = vmatprep.subr.mxu0 0.0
    %398 = vmatpush1.msra.mxu0 0.0
    %399 = vmatprep.subr.mxu0 0.0
    %400 = vmatpush1.msra.mxu0 0.0
    %401 = vmatprep.subr.mxu0 0.0
    %402 = vmatpush1.msra.mxu0 0.0
    %403 = vmatprep.subr.mxu0 0.0
    %404 = vmatpush1.msra.mxu0 0.0
    %405 = vmatprep.subr.mxu0 0.0
    %406 = vmatpush1.msra.mxu0 0.0
    %407 = vmatprep.subr.mxu0 0.0
    %408 = vmatpush1.msra.mxu0 0.0
    %409 = vmatprep.subr.mxu0 0.0
    %410 = vmatpush1.msra.mxu0 0.0
    %411 = vmatprep.subr.mxu0 0.0
    %412 = vmatpush1.msra.mxu0 0.0
    %413 = vmatprep.subr.mxu0 0.0
    %414 = vmatpush1.msra.mxu0 0.0
    %415 = vmatprep.subr.mxu0 0.0
    %416 = vmatpush1.msra.mxu0 0.0
    %417 = vmatprep.subr.mxu0 0.0
    %418 = vmatpush1.msra.mxu0 0.0
    %419 = vmatprep.subr.mxu0 0.0
    %420 = vmatpush1.msra.mxu0 0.0
    %421 = vmatprep.subr.mxu0 0.0
    %422 = vmatpush1.msra.mxu0 0.0
    %423 = vmatprep.subr.mxu0 0.0
    %424 = vmatpush1.msra.mxu0 0.0
    %425 = vmatprep.subr.mxu0 0.0
    %426 = vmatpush1.msra.mxu0 0.0
    %427 = vmatprep.subr.mxu0 0.0
    %428 = vmatpush1.msra.mxu0 0.0
    %429 = vmatprep.subr.mxu0 0.0
    %430 = vmatpush1.msra.mxu0 0.0
    %431 = vmatprep.subr.mxu0 0.0
    %432 = vmatpush1.msra.mxu0 0.0
    %433 = vmatprep.subr.mxu0 0.0
    %434 = vmatpush1.msra.mxu0 0.0
    %435 = vmatprep.subr.mxu0 0.0
    %436 = vmatpush1.msra.mxu0 0.0
    %437 = vmatprep.subr.mxu0 0.0
    %438 = vmatpush1.msra.mxu0 0.0
    %439 = vmatprep.subr.mxu0 0.0
    %440 = vmatpush1.msra.mxu0 0.0
    %441 = vmatprep.subr.mxu0 0.0
    %442 = vmatpush1.msra.mxu0 0.0
    %443 = vmatprep.subr.mxu0 0.0
    %444 = vmatpush1.msra.mxu0 0.0
    %445 = vmatprep.subr.mxu0 0.0
    %446 = vmatpush1.msra.mxu0 0.0
    %447 = vmatprep.subr.mxu0 0.0
    %448 = vmatpush1.msra.mxu0 0.0
    %449 = vmatprep.subr.mxu0 0.0
    %450 = vmatpush1.msra.mxu0 0.0
    %451 = vmatprep.subr.mxu0 0.0
    %452 = vmatpush1.msra.mxu0 0.0
    %453 = vmatprep.subr.mxu0 0.0
    %454 = vmatpush1.msra.mxu0 0.0
    %455 = vmatprep.mubr.f32.mxu0 0.0
    %456 = vmatmul.mubr.f32.gmra.mrb[0].mxu0 %v387
    %v457 = vpop.f32.mrb[0].mxu0
    %v458 = vadd.f32 %v309, %v457
    %v459 = vpop.f32.mrb[0].mxu0
    %460 = vdwg.mxu0
    %v461 = vsel %vm239, %v67, 0
    %463 = vmatprep.subr.mxu0 0.0
    %464 = vmatpush1.msra.mxu0 %v461
    %465 = vmatprep.subr.mxu0 0.0
    %466 = vmatpush1.msra.mxu0 0.0
    %467 = vmatprep.subr.mxu0 0.0
    %468 = vmatpush1.msra.mxu0 0.0
    %469 = vmatprep.subr.mxu0 0.0
    %470 = vmatpush1.msra.mxu0 0.0
    %471 = vmatprep.subr.mxu0 0.0
    %472 = vmatpush1.msra.mxu0 0.0
    %473 = vmatprep.subr.mxu0 0.0
    %474 = vmatpush1.msra.mxu0 0.0
    %475 = vmatprep.subr.mxu0 0.0
    %476 = vmatpush1.msra.mxu0 0.0
    %477 = vmatprep.subr.mxu0 0.0
    %478 = vmatpush1.msra.mxu0 0.0
    %479 = vmatprep.subr.mxu0 0.0
    %480 = vmatpush1.msra.mxu0 0.0
    %481 = vmatprep.subr.mxu0 0.0
    %482 = vmatpush1.msra.mxu0 0.0
    %483 = vmatprep.subr.mxu0 0.0
    %484 = vmatpush1.msra.mxu0 0.0
    %485 = vmatprep.subr.mxu0 0.0
    %486 = vmatpush1.msra.mxu0 0.0
    %487 = vmatprep.subr.mxu0 0.0
    %488 = vmatpush1.msra.mxu0 0.0
    %489 = vmatprep.subr.mxu0 0.0
    %490 = vmatpush1.msra.mxu0 0.0
    %491 = vmatprep.subr.mxu0 0.0
    %492 = vmatpush1.msra.mxu0 0.0
    %493 = vmatprep.subr.mxu0 0.0
    %494 = vmatpush1.msra.mxu0 0.0
    %495 = vmatprep.subr.mxu0 0.0
    %496 = vmatpush1.msra.mxu0 0.0
    %497 = vmatprep.subr.mxu0 0.0
    %498 = vmatpush1.msra.mxu0 0.0
    %499 = vmatprep.subr.mxu0 0.0
    %500 = vmatpush1.msra.mxu0 0.0
    %501 = vmatprep.subr.mxu0 0.0
    %502 = vmatpush1.msra.mxu0 0.0
    %503 = vmatprep.subr.mxu0 0.0
    %504 = vmatpush1.msra.mxu0 0.0
    %505 = vmatprep.subr.mxu0 0.0
    %506 = vmatpush1.msra.mxu0 0.0
    %507 = vmatprep.subr.mxu0 0.0
    %508 = vmatpush1.msra.mxu0 0.0
    %509 = vmatprep.subr.mxu0 0.0
    %510 = vmatpush1.msra.mxu0 0.0
    %511 = vmatprep.subr.mxu0 0.0
    %512 = vmatpush1.msra.mxu0 0.0
    %513 = vmatprep.subr.mxu0 0.0
    %514 = vmatpush1.msra.mxu0 0.0
    %515 = vmatprep.subr.mxu0 0.0
    %516 = vmatpush1.msra.mxu0 0.0
    %517 = vmatprep.subr.mxu0 0.0
    %518 = vmatpush1.msra.mxu0 0.0
    %519 = vmatprep.subr.mxu0 0.0
    %520 = vmatpush1.msra.mxu0 0.0
    %521 = vmatprep.subr.mxu0 0.0
    %522 = vmatpush1.msra.mxu0 0.0
    %523 = vmatprep.subr.mxu0 0.0
    %524 = vmatpush1.msra.mxu0 0.0
    %525 = vmatprep.subr.mxu0 0.0
    %526 = vmatpush1.msra.mxu0 0.0
    %527 = vmatprep.mubr.f32.mxu0 0.0
    %528 = vmatmul.mubr.f32.gmra.mrb[0].mxu0 %v387
    %v529 = vpop.f32.mrb[0].mxu0
    %v530 = vadd.f32 %v383, %v529
    %v531 = vpop.f32.mrb[0].mxu0
    %532 = vdwg.mxu0
    %v533 = vld [vmem:[%s5] sm:$0x1]
    %v535 = vlaneseq
    %v536 = vshrl.u32 %v535, 7
    %v537 = vsub.s32 0, %v536
    %v538 = vrot.slane %v533, %v537
    %v540 = vadd.f32 %v538, %v458
    %v541 = vtanh.pop %v540
    %v542 = vld [vmem:[%s6] sm:$0x1]
    %v544 = vlaneseq
    %v545 = vshrl.u32 %v544, 7
    %v546 = vsub.s32 0, %v545
    %v547 = vrot.slane %v542, %v546
    %v549 = vadd.f32 %v547, %v530
    %v550 = vld [vmem:[%s4] sm:$0x3]
    %v552 = vsel %vm235, %v541, 0
    %v555 = vsel %vm239, %v550, 0
    %557 = vmatprep.subr.mxu0 0.0
    %558 = vmatpush1.msra.mxu0 %v555
    %559 = vmatprep.subr.mxu0 0.0
    %560 = vmatpush1.msra.mxu0 0.0
    %561 = vmatprep.subr.mxu0 0.0
    %562 = vmatpush1.msra.mxu0 0.0
    %563 = vmatprep.subr.mxu0 0.0
    %564 = vmatpush1.msra.mxu0 0.0
    %565 = vmatprep.subr.mxu0 0.0
    %566 = vmatpush1.msra.mxu0 0.0
    %567 = vmatprep.subr.mxu0 0.0
    %568 = vmatpush1.msra.mxu0 0.0
    %569 = vmatprep.subr.mxu0 0.0
    %570 = vmatpush1.msra.mxu0 0.0
    %571 = vmatprep.subr.mxu0 0.0
    %572 = vmatpush1.msra.mxu0 0.0
    %573 = vmatprep.subr.mxu0 0.0
    %574 = vmatpush1.msra.mxu0 0.0
    %575 = vmatprep.subr.mxu0 0.0
    %576 = vmatpush1.msra.mxu0 0.0
    %577 = vmatprep.subr.mxu0 0.0
    %578 = vmatpush1.msra.mxu0 0.0
    %579 = vmatprep.subr.mxu0 0.0
    %580 = vmatpush1.msra.mxu0 0.0
    %581 = vmatprep.subr.mxu0 0.0
    %582 = vmatpush1.msra.mxu0 0.0
    %583 = vmatprep.subr.mxu0 0.0
    %584 = vmatpush1.msra.mxu0 0.0
    %585 = vmatprep.subr.mxu0 0.0
    %586 = vmatpush1.msra.mxu0 0.0
    %587 = vmatprep.subr.mxu0 0.0
    %588 = vmatpush1.msra.mxu0 0.0
    %589 = vmatprep.subr.mxu0 0.0
    %590 = vmatpush1.msra.mxu0 0.0
    %591 = vmatprep.subr.mxu0 0.0
    %592 = vmatpush1.msra.mxu0 0.0
    %593 = vmatprep.subr.mxu0 0.0
    %594 = vmatpush1.msra.mxu0 0.0
    %595 = vmatprep.subr.mxu0 0.0
    %596 = vmatpush1.msra.mxu0 0.0
    %597 = vmatprep.subr.mxu0 0.0
    %598 = vmatpush1.msra.mxu0 0.0
    %599 = vmatprep.subr.mxu0 0.0
    %600 = vmatpush1.msra.mxu0 0.0
    %601 = vmatprep.subr.mxu0 0.0
    %602 = vmatpush1.msra.mxu0 0.0
    %603 = vmatprep.subr.mxu0 0.0
    %604 = vmatpush1.msra.mxu0 0.0
    %605 = vmatprep.subr.mxu0 0.0
    %606 = vmatpush1.msra.mxu0 0.0
    %607 = vmatprep.subr.mxu0 0.0
    %608 = vmatpush1.msra.mxu0 0.0
    %609 = vmatprep.subr.mxu0 0.0
    %610 = vmatpush1.msra.mxu0 0.0
    %611 = vmatprep.subr.mxu0 0.0
    %612 = vmatpush1.msra.mxu0 0.0
    %613 = vmatprep.subr.mxu0 0.0
    %614 = vmatpush1.msra.mxu0 0.0
    %615 = vmatprep.subr.mxu0 0.0
    %616 = vmatpush1.msra.mxu0 0.0
    %617 = vmatprep.subr.mxu0 0.0
    %618 = vmatpush1.msra.mxu0 0.0
    %619 = vmatprep.subr.mxu0 0.0
    %620 = vmatpush1.msra.mxu0 0.0
    %621 = vmatprep.mubr.f32.mxu0 0.0
    %622 = vmatmul.mubr.f32.gmra.mrb[0].mxu0 %v552
    %v623 = vpop.f32.mrb[0].mxu0
    %v624 = vadd.f32 0.0, %v623
    %v625 = vpop.f32.mrb[0].mxu0
    %626 = vdwg.mxu0
    %v627 = vadd.f32 %v549, %v624
    %628 = vst.msk [vmem:[#allocation8] sm:$0xff] %vm76, %v627
    // Predicated region
    $region42: #{_lambda_.1} parent=1 // pred_check
      _
    $region43: #{_lambda_.1} parent=1 // pred_check_branch
      %630 = sbr.rel (0) target = $region45
    $region44: #{_lambda_.1} parent=1 // pred_region
      %s632 = ssub.s32 128, 32
      %633 = vsyncadd [#allocation4], %s632
      %s634 = sshll.u32 [#allocation8], 4
      %s635 = int_to_ptr.vmem [resolvable:$true] %s634
      %640 = dma.vmem_to_hbm [thread:$0]  %s635, 32, %s7, [#allocation4], 32, 32, 2
    $region45: #{_lambda_.1} parent=1 // pred_fallthru
      _
    // Predicated region
    $region46: #{_lambda_.1} parent=1 // pred_check
      _
    $region47: #{_lambda_.1} parent=1 // pred_check_branch
      %642 = sbr.rel (0) target = $region49
    $region48: #{_lambda_.1} parent=1 // pred_region
      %643 = dma.done [#allocation4], 128
    $region49: #{_lambda_.1} parent=1 // pred_fallthru
      _
    %644 = vsyncpa [#allocation3], 1
    %645 = vsyncpa [#allocation6], 1
    %646 = vsyncpa [#allocation4], 1

</llo_original>
